<compile_context>
chip_gen: v7x
topology: tpu7x:2x2x1
jax: 0.10.0
libtpu: 0.0.40
codegen_flags: <defaults>
</compile_context>

<pallas_src>
import functools

import jax
import jax.numpy as jnp
import numpy as np
from jax import lax
from jax.experimental import pallas as pl
from jax.experimental.pallas import tpu as pltpu


# --------------------------------------------------------------------------
# helpers
# --------------------------------------------------------------------------
def _vmem_budget_bytes():
    """Per-generation usable VMEM budget (leave headroom for Mosaic scratch)."""
    try:
        cap = int(pltpu.get_tpu_info().vmem_capacity_bytes)
    except Exception:
        cap = 64 * 1024 * 1024          # conservative (v7x per-TC VMEM)
    return int(cap * 0.75)


def _pick_tile(n, *, limit=1 << 30, min_grid=1):
    """Largest MXU-friendly tile that divides n (256-aligned first for v6e/v7x)."""
    for c in (1024, 512, 256, 128, 64, 32, 16, 8):
        if c <= limit and n % c == 0 and n // c >= min_grid:
            return c
    return n    # small / awkward n: full extent is always a legal block shape


def _build_counts(e_local, nt, mm_dtype):
    """(T, K) local neighbor ids -> (T, nt) per-column multiplicities.

    K is small and static, so this unrolls into K lane-broadcast compares on
    the VPU.  Accumulate in f32 (portable: v5e's VPU has no bf16 ALU) and cast
    to the matmul dtype exactly once.  Ids outside [0, nt) contribute nothing.
    """
    t, k_deg = e_local.shape
    ids = lax.broadcasted_iota(jnp.int32, (t, nt), 1)            # j-independent
    counts = jnp.zeros((t, nt), jnp.float32)
    for kk in range(k_deg):
        counts = counts + (e_local[:, kk:kk + 1] == ids).astype(jnp.float32)
    return counts.astype(mm_dtype)


# --------------------------------------------------------------------------
# kernels
# --------------------------------------------------------------------------
def _resident_kernel(edges_ref, nodes_ref, out_ref, *, inv_n):
    """Whole node table resident in VMEM; one MXU dot per destination-row tile."""
    n_nodes = nodes_ref.shape[0]
    counts = _build_counts(edges_ref[...], n_nodes, nodes_ref.dtype)
    acc = jnp.dot(counts, nodes_ref[...], preferred_element_type=jnp.float32)
    # Reference divides by node_count N (not by K) -- kept intentionally.
    out_ref[...] = (acc * inv_n).astype(out_ref.dtype)


def _stream_kernel(edges_ref, nodes_ref, out_ref, *maybe_acc, nt, inv_n):
    """grid = (row tiles, node tiles); axis 1 streams the node table (reduction)."""
    j = pl.program_id(1)
    acc_ref = maybe_acc[0] if maybe_acc else out_ref      # static choice

    @pl.when(j == 0)
    def _():
        acc_ref[...] = jnp.zeros_like(acc_ref)

    # Local ids for this source-node tile: one cheap (T, K) subtract per step
    # instead of adding j*nt into the (T, nt) iota.
    e_local = edges_ref[...] - j * nt
    counts = _build_counts(e_local, nt, nodes_ref.dtype)
    acc_ref[...] += jnp.dot(counts, nodes_ref[...],
                            preferred_element_type=jnp.float32)

    @pl.when(j == pl.num_programs(1) - 1)
    def _():
        if maybe_acc:                                       # non-f32 output
            out_ref[...] = (acc_ref[...] * inv_n).astype(out_ref.dtype)
        else:                                               # f32 output == acc
            out_ref[...] = out_ref[...] * inv_n


# --------------------------------------------------------------------------
# wrapper
# --------------------------------------------------------------------------
def mean_aggregator(nodes, edges, *, reproduce_discarded_add=True,
                    matmul_dtype=jnp.bfloat16, row_tile=None, node_tile=None,
                    force_streaming=False):
    """nodes: (N, D) float array; edges: (N, K) integer neighbor indices.

    reproduce_discarded_add=True  -> exact PyTorch-forward output (all zeros).
    reproduce_discarded_add=False -> intended aggregation (sum of neighbor
                                     rows / N, as the reference clearly meant).
    """
    N, D = nodes.shape
    _, K = edges.shape
    out_dtype = nodes.dtype

    if reproduce_discarded_add:
        # torch.add result is discarded in the reference -> zeros / N == zeros.
        return jnp.zeros((N, D), out_dtype)

    edges = edges.astype(jnp.int32)
    mm_dtype = np.dtype(matmul_dtype)
    nodes_mm = nodes if nodes.dtype == mm_dtype else nodes.astype(mm_dtype)

    budget = _vmem_budget_bytes()
    mm_bytes = mm_dtype.itemsize
    out_bytes = np.dtype(out_dtype).itemsize
    inv_n = 1.0 / N

    # ------------------ resident path: node table pinned in VMEM ------------
    nodes_resident_bytes = 2 * N * D * mm_bytes           # conservatively dbl-buffered
    if not force_streaming and nodes_resident_bytes <= 0.6 * budget:
        t = row_tile or _pick_tile(N, min_grid=2)         # >=2 steps for v7x's 2 TCs
        assert N % t == 0

        def fits(tt):
            per = (nodes_resident_bytes + 2 * tt * K * 4 + 2 * tt * D * out_bytes
                   + tt * N * (4 + mm_bytes) + tt * D * 4)
            return per <= budget

        while t > 8 and not fits(t) and N % (t // 2) == 0:
            t //= 2

        kernel = functools.partial(_resident_kernel, inv_n=inv_n)
        return pl.pallas_call(
            kernel,
            out_shape=jax.ShapeDtypeStruct((N, D), out_dtype),
            grid=(N // t,),
            in_specs=[
                pl.BlockSpec((t, K), lambda i: (i, 0)),    # edge rows for this tile
                pl.BlockSpec((N, D), lambda i: (0, 0)),    # whole table, DMA'd once
            ],
            out_specs=pl.BlockSpec((t, D), lambda i: (i, 0)),
            compiler_params=pltpu.CompilerParams(
                dimension_semantics=("parallel",),
                vmem_limit_bytes=budget),
        )(edges, nodes_mm)

    # ------------------ streaming path: tile rows x source-node tiles -------
    nt = node_tile or _pick_tile(N, limit=512)
    assert N % nt == 0

    if row_tile is None:
        t = _pick_tile(N, min_grid=2)

        def fits(tt):
            per = (2 * nt * D * mm_bytes            # streamed node tile (dbl-buf)
                   + 2 * tt * K * 4                 # edge tile
                   + 2 * tt * D * out_bytes         # out tile
                   + tt * D * 4                     # f32 accumulator / dot result
                   + tt * nt * (4 + mm_bytes))      # counts-build intermediates
            return per <= budget

        while t > 8 and not fits(t) and N % (t // 2) == 0:
            t //= 2
    else:
        t = row_tile
    assert N % t == 0

    use_scratch = np.dtype(out_dtype) != np.dtype(jnp.float32)
    kernel = functools.partial(_stream_kernel, nt=nt, inv_n=inv_n)
    scratch = [pltpu.VMEM((t, D), jnp.float32)] if use_scratch else []

    return pl.pallas_call(
        kernel,
        out_shape=jax.ShapeDtypeStruct((N, D), out_dtype),
        grid_spec=pltpu.PrefetchScalarGridSpec(
            num_scalar_prefetch=0,
            grid=(N // t, N // nt),
            in_specs=[
                pl.BlockSpec((t, K), lambda i, j: (i, 0)),
                pl.BlockSpec((nt, D), lambda i, j: (j, 0)),
            ],
            out_specs=pl.BlockSpec((t, D), lambda i, j: (i, 0)),
            scratch_shapes=scratch,
        ),
        compiler_params=pltpu.CompilerParams(
            dimension_semantics=("parallel", "arbitrary"),
            vmem_limit_bytes=budget),
    )(edges, nodes_mm)


# --------------------------------------------------------------------------
# demo / correctness check
# --------------------------------------------------------------------------
if __name__ == "__main__":
    key = jax.random.PRNGKey(0)
    k1, k2 = jax.random.split(key)

    N, D, K = 32, 128, 4          # small synthetic graph
    nodes = jax.random.normal(k1, (N, D), dtype=jnp.float32)
    edges = jax.random.randint(k2, (N, K), 0, N, dtype=jnp.int32)

    nodes_np, edges_np = np.asarray(nodes), np.asarray(edges)
    ref_agg = np.stack([nodes_np[edges_np[i]].sum(axis=0) / N for i in range(N)])

    # 1) Exact PyTorch-forward semantics (torch.add result discarded -> zeros).
    out_exact = jax.block_until_ready(mean_aggregator(nodes, edges))
    np.testing.assert_allclose(np.asarray(out_exact),
                               np.zeros((N, D), np.float32), atol=0.0)

    # 2) Intended aggregation, VMEM-resident node table, bf16 MXU operands.
    out_res = jax.block_until_ready(
        mean_aggregator(nodes, edges, reproduce_discarded_add=False))
    np.testing.assert_allclose(np.asarray(out_res), ref_agg, rtol=2e-2, atol=2e-2)

    # 3) Streaming/reduction path (grid (4, 4)), f32 operands for a tight check
    #    of the accumulator init/finalize logic (acc lives directly in out_ref).
    out_stream = jax.block_until_ready(
        mean_aggregator(nodes, edges, reproduce_discarded_add=False,
                        matmul_dtype=jnp.float32, force_streaming=True,
                        row_tile=8, node_tile=8))
    np.testing.assert_allclose(np.asarray(out_stream), ref_agg,
                               rtol=1e-5, atol=1e-5)

    print("KERNEL_OK")
</pallas_src>

<mosaic_0001>
module attributes {stable_mosaic.version = 11 : i64} {
  func.func @_resident_kernel(%arg0: i32, %arg1: memref<16x4xi32, #tpu.memory_space<vmem>>, %arg2: memref<32x128xbf16, #tpu.memory_space<vmem>>, %arg3: memref<16x128xf32, #tpu.memory_space<vmem>>) attributes {dimension_semantics = [#tpu.dimension_semantics<parallel>], iteration_bounds = array<i64: 2>, scalar_prefetch = 0 : i64, scratch_operands = 0 : i64, tpu.core_type = #tpu.core_type<tc>, window_params = [{transform_indices = @transform_0, window_bounds = array<i64: 16, 4>}, {pipeline_mode = #tpu.pipeline_mode<synchronous>, transform_indices = @transform_1, window_bounds = array<i64: 32, 128>}, {transform_indices = @transform_2, window_bounds = array<i64: 16, 128>}]} {
    %c0 = arith.constant 0 : index
    %c0_0 = arith.constant 0 : index
    %0 = vector.load %arg1[%c0, %c0_0] : memref<16x4xi32, #tpu.memory_space<vmem>>, vector<16x4xi32>
    %1 = tpu.iota {dimensions = array<i32: 1>} : vector<16x32xi32>
    %cst = arith.constant 0.000000e+00 : f32
    %2 = vector.broadcast %cst : f32 to vector<16x32xf32>
    %3 = vector.extract_strided_slice %0 {offsets = [0, 0], sizes = [16, 1], strides = [1, 1]} : vector<16x4xi32> to vector<16x1xi32>
    %4 = vector.broadcast %3 : vector<16x1xi32> to vector<16x32xi32>
    %5 = arith.cmpi eq, %4, %1 : vector<16x32xi32>
    %6 = arith.extui %5 : vector<16x32xi1> to vector<16x32xi32>
    %7 = arith.sitofp %6 : vector<16x32xi32> to vector<16x32xf32>
    %8 = arith.addf %2, %7 : vector<16x32xf32>
    %9 = vector.extract_strided_slice %0 {offsets = [0, 1], sizes = [16, 1], strides = [1, 1]} : vector<16x4xi32> to vector<16x1xi32>
    %10 = vector.broadcast %9 : vector<16x1xi32> to vector<16x32xi32>
    %11 = arith.cmpi eq, %10, %1 : vector<16x32xi32>
    %12 = arith.extui %11 : vector<16x32xi1> to vector<16x32xi32>
    %13 = arith.sitofp %12 : vector<16x32xi32> to vector<16x32xf32>
    %14 = arith.addf %8, %13 : vector<16x32xf32>
    %15 = vector.extract_strided_slice %0 {offsets = [0, 2], sizes = [16, 1], strides = [1, 1]} : vector<16x4xi32> to vector<16x1xi32>
    %16 = vector.broadcast %15 : vector<16x1xi32> to vector<16x32xi32>
    %17 = arith.cmpi eq, %16, %1 : vector<16x32xi32>
    %18 = arith.extui %17 : vector<16x32xi1> to vector<16x32xi32>
    %19 = arith.sitofp %18 : vector<16x32xi32> to vector<16x32xf32>
    %20 = arith.addf %14, %19 : vector<16x32xf32>
    %21 = vector.extract_strided_slice %0 {offsets = [0, 3], sizes = [16, 1], strides = [1, 1]} : vector<16x4xi32> to vector<16x1xi32>
    %22 = vector.broadcast %21 : vector<16x1xi32> to vector<16x32xi32>
    %23 = arith.cmpi eq, %22, %1 : vector<16x32xi32>
    %24 = arith.extui %23 : vector<16x32xi1> to vector<16x32xi32>
    %25 = arith.sitofp %24 : vector<16x32xi32> to vector<16x32xf32>
    %26 = arith.addf %20, %25 : vector<16x32xf32>
    %27 = arith.truncf %26 : vector<16x32xf32> to vector<16x32xbf16>
    %c0_1 = arith.constant 0 : index
    %c0_2 = arith.constant 0 : index
    %28 = vector.load %arg2[%c0_1, %c0_2] : memref<32x128xbf16, #tpu.memory_space<vmem>>, vector<32x128xbf16>
    %cst_3 = arith.constant dense<0.000000e+00> : vector<16x128xf32>
    %29 = tpu.matmul %27, %28, %cst_3 {dimension_numbers = #tpu.dot_dimension_numbers<[1], [0], [0], [1], [0, 0, 1, 1], [], []>} : vector<16x32xbf16>, vector<32x128xbf16>, vector<16x128xf32> -> vector<16x128xf32>
    %cst_4 = arith.constant 3.125000e-02 : f32
    %30 = vector.broadcast %cst_4 : f32 to vector<16x128xf32>
    %31 = arith.mulf %29, %30 : vector<16x128xf32>
    %c0_5 = arith.constant 0 : index
    %c0_6 = arith.constant 0 : index
    %32 = vector.load %arg3[%c0_5, %c0_6] : memref<16x128xf32, #tpu.memory_space<vmem>>, vector<16x128xf32>
    tpu.vector_store %arg3[%c0_5, %c0_6], %31 {strides = array<i32>} : memref<16x128xf32, #tpu.memory_space<vmem>>, vector<16x128xf32>,
    return
  }
  func.func @transform_0(%arg0: i32) -> (i32, i32) {
    %c0_i32 = arith.constant 0 : i32
    %c0_i32_0 = arith.constant 0 : i32
    return %arg0, %c0_i32 : i32, i32
  }
  func.func @transform_1(%arg0: i32) -> (i32, i32) {
    %c0_i32 = arith.constant 0 : i32
    %c0_i32_0 = arith.constant 0 : i32
    %c0_i32_1 = arith.constant 0 : i32
    return %c0_i32, %c0_i32_0 : i32, i32
  }
  func.func @transform_2(%arg0: i32) -> (i32, i32) {
    %c0_i32 = arith.constant 0 : i32
    %c0_i32_0 = arith.constant 0 : i32
    return %arg0, %c0_i32 : i32, i32
  }
}

</mosaic_0001>

<llo_original>
// kernel: tpu_custom_call.1
$region0: #{tpu_custom_call.1}
  #allocation0 [shape = 'u32[]', space=smem, size = 0x4, offset = 0x4, fixed_abs, tag = 'smem constant byte address 0x4 - core index']
  #allocation1 [shape = 'u32[144,128]{1,0:T(1,128)}', space=vmem, size = 0x12000, scoped, tag = 'internal scratch']
  %s0 = inlined_call_operand.vmem [shape: s32[32,4], index: 0, kind: input, shape index: {}]
  %s1 = inlined_call_operand.vmem [shape: bf16[32,128], index: 1, kind: input, shape index: {}]
  %s2 = inlined_call_operand.hbm [shape: f32[32,128], index: 2, kind: output, shape index: {}]
  %s3 = sld [smem:[#allocation0]]
  $region41: #{tpu_custom_call.1} parent=0
    _
  %s5 = ssub.s32 1, %s3
  %s6 = scalar_select 0, %s5, %s3
  $region1: #{tpu_custom_call.1} parent=0
    #allocation2 [shape = 'u8[16384]{0}', space=vmem, size = 0x4000, scoped, tag = 'output window, operand 0']
    #allocation3 [shape = 's32[2]{0}', space=sflag, size = 0x8, scoped, tag = 'scoped memory for tpu_custom_call.1']
    %7 = vsyncpa [#allocation3], 0
    %s8 = scalar_lea.sflag [#allocation3], 1
    %9 = vsyncpa %s8, 0
    loop: start=0, step=1, limit=4
    $region2: #{tpu_custom_call.1} parent=1 // loop_pre_header
      _
    $region3: #{tpu_custom_call.1} parent=1 // loop_header
      %s11 = sphi 0, %s15
      %p12 = scmp.ge.s32.totalorder %s11, 4
      %s21 = sphi 0, %s23
      %s24 = sphi 0, %s21
      %s25 = sphi 0, %s24
      %s41 = sphi 0, %s25
      %s45 = sphi 0, %s45
      %s47 = sphi 0, %s45
      %s48 = sphi 0, %s47
      %s62 = sphi 0, %s48
      %s68 = sphi 0, %s70
      %s71 = sphi 0, %s68
      %s72 = sphi 0, %s71
      %s88 = sphi 0, %s72
    $region4: #{tpu_custom_call.1} parent=1 // loop_header_branch
      %14 = sbr.rel (%p12) target = $region8
    $region5: #{tpu_custom_call.1} parent=1 // loop_body
      %s16 = ssub.s32 %s11, 1
      %s17 = ssub.s32 %s11, 2
      %s18 = sadd.s32 %s11, 1
      %s19 = ssub.s32 %s11, %s18
      %p20 = scmp.eq.s32.totalorder %s19, 0
      %s22 = sadd.s32 %s21, 1
      %s23 = scalar_select %p20, %s21, %s22
      %p26 = pneg %p20
      %p27 = scmp.eq.s32.totalorder %s11, 1
      %p28 = por %p26, %p27
      %p29 = scmp.ne.s32.totalorder %s21, %s24
      %p30 = scmp.eq.s32.totalorder %s11, 0
      %p31 = por %p29, %p30
      %p32 = scmp.ne.s32.totalorder %s21, %s24
      %p33 = scmp.eq.s32.totalorder %s16, 1
      %p34 = por %p32, %p33
      %p35 = scmp.ne.s32.totalorder %s24, %s25
      %p36 = scmp.eq.s32.totalorder %s16, 0
      %p37 = por %p35, %p36
      %p38 = scmp.ne.s32.totalorder %s24, %s25
      %p39 = scmp.eq.s32.totalorder %s17, 1
      %p40 = por %p38, %p39
      %p42 = scmp.ne.s32.totalorder %s25, %s41
      %p43 = scmp.eq.s32.totalorder %s17, 0
      %p44 = por %p42, %p43
      %s46 = sadd.s32 %s45, 1
      %p49 = scmp.eq.s32.totalorder %s11, 1
      %p50 = scmp.ne.s32.totalorder %s45, %s47
      %p51 = scmp.eq.s32.totalorder %s11, 0
      %p52 = por %p50, %p51
      %p53 = scmp.ne.s32.totalorder %s45, %s47
      %p54 = scmp.eq.s32.totalorder %s16, 1
      %p55 = por %p53, %p54
      %p56 = scmp.ne.s32.totalorder %s47, %s48
      %p57 = scmp.eq.s32.totalorder %s16, 0
      %p58 = por %p56, %p57
      %p59 = scmp.ne.s32.totalorder %s47, %s48
      %p60 = scmp.eq.s32.totalorder %s17, 1
      %p61 = por %p59, %p60
      %p63 = scmp.ne.s32.totalorder %s48, %s62
      %p64 = scmp.eq.s32.totalorder %s17, 0
      %p65 = por %p63, %p64
      %s66 = ssub.s32 %s11, %s18
      %p67 = scmp.eq.s32.totalorder %s66, 0
      %s69 = sadd.s32 %s68, 1
      %s70 = scalar_select %p67, %s68, %s69
      %p73 = pneg %p67
      %p74 = scmp.eq.s32.totalorder %s11, 1
      %p75 = por %p73, %p74
      %p76 = scmp.ne.s32.totalorder %s68, %s71
      %p77 = scmp.eq.s32.totalorder %s11, 0
      %p78 = por %p76, %p77
      %p79 = scmp.ne.s32.totalorder %s68, %s71
      %p80 = scmp.eq.s32.totalorder %s16, 1
      %p81 = por %p79, %p80
      %p82 = scmp.ne.s32.totalorder %s71, %s72
      %p83 = scmp.eq.s32.totalorder %s16, 0
      %p84 = por %p82, %p83
      %p85 = scmp.ne.s32.totalorder %s71, %s72
      %p86 = scmp.eq.s32.totalorder %s17, 1
      %p87 = por %p85, %p86
      %p89 = scmp.ne.s32.totalorder %s72, %s88
      %p90 = scmp.eq.s32.totalorder %s17, 0
      %p91 = por %p89, %p90
      %p92 = scmp.le.s32.totalorder 1, %s11
      %p93 = scmp.lt.s32.totalorder %s11, 3
      %p94 = pnand %p92, %p93
      %p95 = pneg %p94
      // Predicated region
      $region9: #{tpu_custom_call.1} parent=5 // pred_check
        _
      $region10: #{tpu_custom_call.1} parent=5 // pred_check_branch
        %97 = sbr.rel (%p94) target = $region12
      $region11: #{tpu_custom_call.1} parent=5 // pred_region
        %s98 = ssub.s32 %s11, 1
        // Predicated region
        $region13: #{tpu_custom_call.1} parent=11 // pred_check
          %p99 = pneg %p58
        $region14: #{tpu_custom_call.1} parent=11 // pred_check_branch
          %101 = sbr.rel (%p99) target = $region16
        $region15: #{tpu_custom_call.1} parent=11 // pred_region
          _
        $region16: #{tpu_custom_call.1} parent=11 // pred_fallthru
          _
      $region12: #{tpu_custom_call.1} parent=5 // pred_fallthru
        _
      %p102 = scmp.lt.s32.totalorder %s11, 2
      // Predicated region
      $region17: #{tpu_custom_call.1} parent=5 // pred_check
        %p103 = pneg %p102
      $region18: #{tpu_custom_call.1} parent=5 // pred_check_branch
        %105 = sbr.rel (%p103) target = $region20
      $region19: #{tpu_custom_call.1} parent=5 // pred_region
        // Predicated region
        $region21: #{tpu_custom_call.1} parent=19 // pred_check
          %p106 = pneg %p31
        $region22: #{tpu_custom_call.1} parent=19 // pred_check_branch
          %108 = sbr.rel (%p106) target = $region24
        $region23: #{tpu_custom_call.1} parent=19 // pred_region
          %s109 = smul.u32 2, %s11
          %p110 = scmp.lt.s32.totalorder %s109, 3
          %s111 = scalar_select %p110, %s109, 3
          %s112 = smul.addr %s111, 8
          %s113 = scalar_lea.vmem %s0, %s112
          %s114 = smul.u32 2, %s11
        $region24: #{tpu_custom_call.1} parent=19 // pred_fallthru
          _
      $region20: #{tpu_custom_call.1} parent=5 // pred_fallthru
        _
      %p115 = scmp.le.s32.totalorder 1, %s11
      %p116 = scmp.lt.s32.totalorder %s11, 3
      %p117 = pnand %p115, %p116
      %p118 = pneg %p117
      // Predicated region
      $region25: #{tpu_custom_call.1} parent=5 // pred_check
        _
      $region26: #{tpu_custom_call.1} parent=5 // pred_check_branch
        %120 = sbr.rel (%p117) target = $region28
      $region27: #{tpu_custom_call.1} parent=5 // pred_region
        %s121 = ssub.s32 %s11, 1
        %s122 = smul.u32 2, %s16
        %p123 = scmp.lt.s32.totalorder %s122, 3
        %s124 = scalar_select %p123, %s122, 3
        %s125 = smul.addr %s124, 8
        %s126 = scalar_lea.vmem %s0, %s125
        %p127 = pneg %p37
        %p128 = pneg %p34
        %p129 = pneg %p58
        %p130 = pneg %p55
        %p131 = pneg %p84
        %p132 = pneg %p81
        %s133 = sand.u32 %s71, 1
        %s134 = scalar_lea.sflag [#allocation3], %s133
        %s135 = sand.u32 %s71, 1
        %s136 = smul.addr %s135, 16
        %s137 = scalar_lea.vmem [#allocation2], %s136
        %s138 = smul.u32 2, %s16
        %p139 = scmp.lt.s32.totalorder %s138, 3
        %s140 = scalar_select %p139, %s138, 3
        %s141 = smul.addr %s140, 8
        %s142 = scalar_lea.vmem %s0, %s141
        %s143 = smul.u32 2, %s16
        %s144 = smul.u32 2, %s16
        %v146 = vld [vmem:[%s142] sm:$0xff]
        %v147 = vld [vmem:[%s142 + $0x8] sm:$0xff]
        %v148 = vlaneseq
        %v149 = vand.u32 %v148, 127
        %150 = vset.pattern.permute.xlu0 0
        %151 = vperm.xlu0 %150, %v146
        %v152 = vpop.permute.xlu0 %151
        %153 = vset.pattern.permute.xlu0 0
        %154 = vperm.xlu0 %153, %v147
        %v155 = vpop.permute.xlu0 %154
        %vm156 = vcmp.eq.s32.totalorder %v152, %v149
        %vm157 = vcmp.eq.s32.totalorder %v155, %v149
        %v158 = vsel %vm156, 1, 0
        %v159 = vsel %vm157, 1, 0
        %v160 = vcvt.s32.f32 %v158
        %v161 = vcvt.s32.f32 %v159
        %v162 = vadd.f32 %v160, 0.0
        %v163 = vadd.f32 %v161, 0.0
        %164 = vset.pattern.permute.xlu0 1
        %165 = vperm.xlu0 %164, %v146
        %v166 = vpop.permute.xlu0 %165
        %167 = vset.pattern.permute.xlu0 1
        %168 = vperm.xlu0 %167, %v147
        %v169 = vpop.permute.xlu0 %168
        %vm170 = vcmp.eq.s32.totalorder %v166, %v149
        %vm171 = vcmp.eq.s32.totalorder %v169, %v149
        %v172 = vsel %vm170, 1, 0
        %v173 = vsel %vm171, 1, 0
        %v174 = vcvt.s32.f32 %v172
        %v175 = vcvt.s32.f32 %v173
        %v176 = vadd.f32 %v162, %v174
        %v177 = vadd.f32 %v163, %v175
        %178 = vset.pattern.permute.xlu0 2
        %179 = vperm.xlu0 %178, %v146
        %v180 = vpop.permute.xlu0 %179
        %181 = vset.pattern.permute.xlu0 2
        %182 = vperm.xlu0 %181, %v147
        %v183 = vpop.permute.xlu0 %182
        %vm184 = vcmp.eq.s32.totalorder %v180, %v149
        %vm185 = vcmp.eq.s32.totalorder %v183, %v149
        %v186 = vsel %vm184, 1, 0
        %v187 = vsel %vm185, 1, 0
        %v188 = vcvt.s32.f32 %v186
        %v189 = vcvt.s32.f32 %v187
        %v190 = vadd.f32 %v176, %v188
        %v191 = vadd.f32 %v177, %v189
        %192 = vset.pattern.permute.xlu0 3
        %193 = vperm.xlu0 %192, %v146
        %v194 = vpop.permute.xlu0 %193
        %195 = vset.pattern.permute.xlu0 3
        %196 = vperm.xlu0 %195, %v147
        %v197 = vpop.permute.xlu0 %196
        %vm198 = vcmp.eq.s32.totalorder %v194, %v149
        %vm199 = vcmp.eq.s32.totalorder %v197, %v149
        %v200 = vsel %vm198, 1, 0
        %v201 = vsel %vm199, 1, 0
        %v202 = vcvt.s32.f32 %v200
        %v203 = vcvt.s32.f32 %v201
        %v204 = vadd.f32 %v190, %v202
        %v205 = vadd.f32 %v191, %v203
        %v206 = vpack.c.bf16 %v205, %v204
        %v207 = vld [vmem:[%s1] sm:$0xf]
        %v208 = vld [vmem:[%s1 + $0x4] sm:$0xf]
        %v209 = vld [vmem:[%s1 + $0x8] sm:$0xf]
        %v210 = vld [vmem:[%s1 + $0xc] sm:$0xf]
        %v215 = vunpack.c.l.b16 %v207
        %v216 = vunpack.c.l.b16 %v208
        %v217 = vunpack.c.l.b16 %v209
        %v218 = vunpack.c.l.b16 %v210
        %v219 = vpack.c.b16 %v216, %v215
        %v220 = vpack.c.b16 %v218, %v217
        %vm223 = vcmask 261120
        %v225 = vsel %vm223, %v206, 0
        %227 = vmatprep.subr.bf16.mxu0 0
        %228 = vmatpush1.bf16.msra.mxu0 %v219
        %229 = vmatprep.subr.bf16.mxu0 0
        %230 = vmatpush1.bf16.msra.mxu0 %v220
        %231 = vmatprep.subr.bf16.mxu0 0
        %232 = vmatpush1.bf16.msra.mxu0 0
        %233 = vmatprep.subr.bf16.mxu0 0
        %234 = vmatpush1.bf16.msra.mxu0 0
        %235 = vmatprep.subr.bf16.mxu0 0
        %236 = vmatpush1.bf16.msra.mxu0 0
        %237 = vmatprep.subr.bf16.mxu0 0
        %238 = vmatpush1.bf16.msra.mxu0 0
        %239 = vmatprep.subr.bf16.mxu0 0
        %240 = vmatpush1.bf16.msra.mxu0 0
        %241 = vmatprep.subr.bf16.mxu0 0
        %242 = vmatpush1.bf16.msra.mxu0 0
        %243 = vmatprep.subr.bf16.mxu0 0
        %244 = vmatpush1.bf16.msra.mxu0 0
        %245 = vmatprep.subr.bf16.mxu0 0
        %246 = vmatpush1.bf16.msra.mxu0 0
        %247 = vmatprep.subr.bf16.mxu0 0
        %248 = vmatpush1.bf16.msra.mxu0 0
        %249 = vmatprep.subr.bf16.mxu0 0
        %250 = vmatpush1.bf16.msra.mxu0 0
        %251 = vmatprep.subr.bf16.mxu0 0
        %252 = vmatpush1.bf16.msra.mxu0 0
        %253 = vmatprep.subr.bf16.mxu0 0
        %254 = vmatpush1.bf16.msra.mxu0 0
        %255 = vmatprep.subr.bf16.mxu0 0
        %256 = vmatpush1.bf16.msra.mxu0 0
        %257 = vmatprep.subr.bf16.mxu0 0
        %258 = vmatpush1.bf16.msra.mxu0 0
        %259 = vmatprep.mubr.bf16.mxu0 0
        %260 = vmatmul.mubr.bf16.gmra.mrb[0].mxu0 %v225
        %v261 = vpop.f32.mrb[0].mxu0
        %v262 = vadd.f32 0.0, %v261
        %v263 = vpop.f32.mrb[0].mxu0
        %v264 = vpop.f32.mrb[0].mxu0
        %v265 = vadd.f32 0.0, %v264
        %v266 = vpop.f32.mrb[0].mxu0
        %267 = vdwg.mxu0
        %v268 = vmul.f32 %v262, 0.03125
        %v269 = vmul.f32 %v265, 0.03125
        %270 = vst [vmem:[%s137] sm:$0xff] %v268
        %271 = vst [vmem:[%s137 + $0x8] sm:$0xff] %v269
        %s272 = sand.u32 %s71, 1
        %s273 = scalar_lea.sflag [#allocation3], %s272
        %s274 = sand.u32 %s71, 1
        %s275 = smul.addr %s274, 16
        %s276 = scalar_lea.vmem [#allocation2], %s275
        // Predicated region
        $region29: #{tpu_custom_call.1} parent=27 // pred_check
          %p277 = pneg %p81
        $region30: #{tpu_custom_call.1} parent=27 // pred_check_branch
          %279 = sbr.rel (%p277) target = $region32
        $region31: #{tpu_custom_call.1} parent=27 // pred_region
          %s280 = smul.u32 2, %s16
          %s282 = ssub.s32 256, 256
          %283 = vsyncadd %s273, %s282
          %s284 = smul.addr %s280, 128
          %s285 = scalar_lea.hbm %s2, %s284
          %s286 = sshll.u32 %s276, 4
          %s287 = int_to_ptr.vmem [resolvable:$true] %s286
          %292 = dma.vmem_to_hbm [thread:$0]  %s287, 256, %s285, %s273, 128, 128, 8
        $region32: #{tpu_custom_call.1} parent=27 // pred_fallthru
          _
      $region28: #{tpu_custom_call.1} parent=5 // pred_fallthru
        _
      %p293 = scmp.le.s32.totalorder 2, %s11
      // Predicated region
      $region33: #{tpu_custom_call.1} parent=5 // pred_check
        %p294 = pneg %p293
      $region34: #{tpu_custom_call.1} parent=5 // pred_check_branch
        %296 = sbr.rel (%p294) target = $region36
      $region35: #{tpu_custom_call.1} parent=5 // pred_region
        %s297 = ssub.s32 %s11, 2
        // Predicated region
        $region37: #{tpu_custom_call.1} parent=35 // pred_check
          %p298 = pneg %p87
        $region38: #{tpu_custom_call.1} parent=35 // pred_check_branch
          %300 = sbr.rel (%p298) target = $region40
        $region39: #{tpu_custom_call.1} parent=35 // pred_region
          %s301 = sand.u32 %s72, 1
          %s302 = scalar_lea.sflag [#allocation3], %s301
          %s303 = sand.u32 %s72, 1
          %s304 = smul.addr %s303, 16
          %s305 = scalar_lea.vmem [#allocation2], %s304
          %306 = dma.done %s302, 256
        $region40: #{tpu_custom_call.1} parent=35 // pred_fallthru
          _
      $region36: #{tpu_custom_call.1} parent=5 // pred_fallthru
        _
    $region6: #{tpu_custom_call.1} parent=1 // loop_footer
      %s15 = sadd.s32 1, %s11
    $region7: #{tpu_custom_call.1} parent=1 // loop_footer_branch
      %10 = sbr.rel target = $region3
    $region8: #{tpu_custom_call.1} parent=1 // loop_exit
      _
    %307 = vsyncpa [#allocation3], 1
    %s308 = scalar_lea.sflag [#allocation3], 1
    %309 = vsyncpa %s308, 1

</llo_original>
